<compile_context>
chip_gen: v5e
topology: v5e:2x2
jax: 0.10.0
libtpu: 0.0.40
codegen_flags: <defaults>
</compile_context>

<pallas_src>
import functools

import jax
import jax.numpy as jnp
from jax.experimental import pallas as pl
from jax.experimental.pallas import tpu as pltpu


def _round_up(x, m):
    return ((x + m - 1) // m) * m


def _cdiv(a, b):
    return (a + b - 1) // b


def _vmem_capacity_bytes():
    """Physical VMEM of the attached TPU; conservative 64 MiB (v7x) fallback."""
    try:
        return int(pltpu.get_tpu_info().vmem_capacity_bytes)
    except Exception:
        return 64 * 1024 * 1024


# ----------------------------------------------------------------------------- 
# One-time parameter preparation (do NOT run per training/inference step).
# -----------------------------------------------------------------------------
def prepare_params(w1, b1, w2, b2, compute_dtype=jnp.bfloat16):
    """Pads the hidden and embedding dims up to multiples of 128 (lane-dense
    blocks, unmasked stores), casts weights once to the MXU compute dtype and
    keeps biases as f32 row vectors for the f32 epilogue."""
    d_in, d_hidden = w1.shape
    e = w2.shape[1]
    dhp = _round_up(d_hidden, 128)
    ep = _round_up(e, 128)
    if dhp != d_hidden:
        w1 = jnp.pad(w1, ((0, 0), (0, dhp - d_hidden)))
        b1 = jnp.pad(b1, (0, dhp - d_hidden))
        w2 = jnp.pad(w2, ((0, dhp - d_hidden), (0, 0)))
    if ep != e:
        w2 = jnp.pad(w2, ((0, 0), (0, ep - e)))
        b2 = jnp.pad(b2, (0, ep - e))
    w1c = w1.astype(compute_dtype)
    w2c = w2.astype(compute_dtype)
    b1r = b1.reshape(1, dhp).astype(jnp.float32)
    b2r = b2.reshape(1, ep).astype(jnp.float32)
    return w1c, b1r, w2c, b2r


# ----------------------------------------------------------------------------- 
# Kernels
# -----------------------------------------------------------------------------
def _make_resident_kernel(hidden_block):
    """Weights fully resident in VMEM; hidden dim processed in 128-aligned
    chunks so only a (tm, hidden_block) slab of f32/bf16 intermediate is live
    and MXU / VPU work of adjacent chunks overlaps."""

    def kernel(x_ref, w1_ref, b1_ref, w2_ref, b2_ref, o_ref):
        x = x_ref[...]
        d_hidden = w1_ref.shape[1]
        acc = None
        for off in range(0, d_hidden, hidden_block):
            cs = min(hidden_block, d_hidden - off)
            h = jnp.dot(x, w1_ref[:, pl.ds(off, cs)],
                        preferred_element_type=jnp.float32)
            h = jnp.maximum(h + b1_ref[:, pl.ds(off, cs)], 0.0)
            part = jnp.dot(h.astype(w2_ref.dtype), w2_ref[pl.ds(off, cs), :],
                           preferred_element_type=jnp.float32)
            acc = part if acc is None else acc + part
        o_ref[...] = (acc + b2_ref[...]).astype(o_ref.dtype)

    return kernel


def _ktiled_kernel(x_ref, w1_ref, b1_ref, w2_ref, b2_ref, o_ref, acc_ref):
    """Streamed-weight path for hidden dims too large for full residency:
    grid axis 1 walks hidden-dim blocks; f32 accumulator scratch with
    pl.when init / finalize keeps the output write lane-dense and single."""
    k = pl.program_id(1)

    @pl.when(k == 0)
    def _():
        acc_ref[...] = jnp.zeros_like(acc_ref)

    h = jnp.dot(x_ref[...], w1_ref[...], preferred_element_type=jnp.float32)
    h = jnp.maximum(h + b1_ref[...], 0.0)
    acc_ref[...] += jnp.dot(h.astype(w2_ref.dtype), w2_ref[...],
                            preferred_element_type=jnp.float32)

    @pl.when(k == pl.num_programs(1) - 1)
    def _():
        o_ref[...] = (acc_ref[...] + b2_ref[...]).astype(o_ref.dtype)


def _resident_spec(shape):
    """Grid-invariant (weight/bias) operand: fully resident in VMEM,
    single-buffered when the running JAX supports pipeline_mode."""
    index_map = lambda i: tuple(0 for _ in shape)
    if hasattr(pl, "Buffered"):
        return pl.BlockSpec(shape, index_map, pipeline_mode=pl.Buffered(1))
    return pl.BlockSpec(shape, index_map)


# ----------------------------------------------------------------------------- 
# Wrapper
# -----------------------------------------------------------------------------
@functools.partial(
    jax.jit,
    static_argnames=("embedding_dim", "tile_m", "hidden_block", "k_block",
                     "force_ktiled"))
def projection_head(x, w1c, b1r, w2c, b2r, *, embedding_dim, tile_m=256,
                    hidden_block=512, k_block=None, force_ktiled=None):
    """x: (B, D) activations; w1c/b1r/w2c/b2r from prepare_params.
    Returns (B, embedding_dim) in x.dtype."""
    B, d_in = x.shape
    d_hidden = w1c.shape[1]          # 128-padded hidden dim
    ep = w2c.shape[1]                # 128-padded embedding dim
    out_dtype = x.dtype
    cdt = w1c.dtype
    cb = jnp.dtype(cdt).itemsize
    ob = jnp.dtype(out_dtype).itemsize

    # ---- batch tiling: multiple of 16 (bf16 sublane packing); >= 2 tiles when
    #      B allows so the "parallel" axis can shard across v7x's 2 TCs.
    tm = max(16, min(_round_up(tile_m, 16), _round_up(B, 16)))
    if _round_up(B, tm) // tm < 2 and B >= 32:
        tm = max(16, _round_up(_cdiv(B, 2), 16))
    Bp = _round_up(B, tm)
    num_m = Bp // tm

    xc = x if x.dtype == cdt else x.astype(cdt)
    if Bp != B:
        xc = jnp.pad(xc, ((0, Bp - B), (0, 0)))

    # ---- generation-aware VMEM budget (leave ~20% headroom for Mosaic scratch)
    budget = int(_vmem_capacity_bytes() * 0.8)
    margin = 8 * 1024 * 1024

    hb = max(128, (min(hidden_block, d_hidden) // 128) * 128)
    weight_bytes = (d_in * d_hidden * cb + d_hidden * ep * cb
                    + (d_hidden + ep) * 4)
    resident_needed = (weight_bytes                     # single-buffered weights
                       + 2 * tm * d_in * cb             # double-buffered x tiles
                       + 2 * tm * ep * ob               # double-buffered out tiles
                       + tm * hb * (4 + cb)             # f32 h chunk + bf16 copy
                       + tm * ep * 4)                   # f32 partial accumulator

    use_ktiled = (resident_needed + margin > budget
                  if force_ktiled is None else force_ktiled)

    flops = 2 * Bp * d_in * d_hidden + 2 * Bp * d_hidden * ep

    if not use_ktiled:
        cost = pl.CostEstimate(
            flops=flops, transcendentals=0,
            bytes_accessed=Bp * d_in * cb + weight_bytes + Bp * ep * ob)
        out = pl.pallas_call(
            _make_resident_kernel(hb),
            out_shape=jax.ShapeDtypeStruct((Bp, ep), out_dtype),
            grid_spec=pltpu.PrefetchScalarGridSpec(
                num_scalar_prefetch=0,
                grid=(num_m,),
                in_specs=[
                    pl.BlockSpec((tm, d_in), lambda i: (i, 0)),   # x tile (pipelined)
                    _resident_spec((d_in, d_hidden)),             # W1
                    _resident_spec((1, d_hidden)),                # b1
                    _resident_spec((d_hidden, ep)),               # W2
                    _resident_spec((1, ep)),                      # b2
                ],
                out_specs=pl.BlockSpec((tm, ep), lambda i: (i, 0)),
            ),
            compiler_params=pltpu.CompilerParams(
                dimension_semantics=("parallel",),
                vmem_limit_bytes=min(budget, max(resident_needed + margin,
                                                 32 * 1024 * 1024)),
            ),
            cost_estimate=cost,
        )(xc, w1c, b1r, w2c, b2r)
    else:
        # Hidden-dim block: largest of {512, 384, 256, 128} dividing the
        # (128-padded) hidden dim, unless the caller forces one.
        kb = (next(c for c in (512, 384, 256, 128) if d_hidden % c == 0)
              if k_block is None else k_block)
        assert d_hidden % kb == 0, "k_block must divide the padded hidden dim"
        num_k = d_hidden // kb
        ktiled_needed = (2 * d_in * kb * cb + 2 * kb * ep * cb      # streamed W1/W2
                         + 2 * (kb + ep) * 4                        # streamed b1/b2
                         + 2 * tm * d_in * cb + 2 * tm * ep * ob    # x / out tiles
                         + tm * ep * 4 + tm * kb * (4 + cb))        # acc + h chunk
        cost = pl.CostEstimate(
            flops=flops, transcendentals=0,
            bytes_accessed=Bp * d_in * cb + num_m * weight_bytes + Bp * ep * ob)
        out = pl.pallas_call(
            _ktiled_kernel,
            out_shape=jax.ShapeDtypeStruct((Bp, ep), out_dtype),
            grid_spec=pltpu.PrefetchScalarGridSpec(
                num_scalar_prefetch=0,
                grid=(num_m, num_k),
                in_specs=[
                    pl.BlockSpec((tm, d_in), lambda i, k: (i, 0)),  # x (resident over k)
                    pl.BlockSpec((d_in, kb), lambda i, k: (0, k)),  # W1[:, kblk]
                    pl.BlockSpec((1, kb), lambda i, k: (0, k)),     # b1[kblk]
                    pl.BlockSpec((kb, ep), lambda i, k: (k, 0)),    # W2[kblk, :]
                    pl.BlockSpec((1, ep), lambda i, k: (0, 0)),     # b2
                ],
                out_specs=pl.BlockSpec((tm, ep), lambda i, k: (i, 0)),
                scratch_shapes=[pltpu.VMEM((tm, ep), jnp.float32)],
            ),
            compiler_params=pltpu.CompilerParams(
                dimension_semantics=("parallel", "arbitrary"),
                vmem_limit_bytes=min(budget, max(ktiled_needed + margin,
                                                 32 * 1024 * 1024)),
            ),
            cost_estimate=cost,
        )(xc, w1c, b1r, w2c, b2r)

    if Bp == B and ep == embedding_dim:
        return out
    return out[:B, :embedding_dim]


# ----------------------------------------------------------------------------- 
# Init + demo
# -----------------------------------------------------------------------------
def init_params(key, resnet_dim, embedding_dim, dtype=jnp.float32):
    """nn.Linear-style init: U(-1/sqrt(fan_in), 1/sqrt(fan_in)); weights
    returned in (in, out) layout for the kernel."""
    k1, k2, k3, k4 = jax.random.split(key, 4)
    lim = 1.0 / (resnet_dim ** 0.5)
    w1 = jax.random.uniform(k1, (resnet_dim, resnet_dim), dtype, -lim, lim)
    b1 = jax.random.uniform(k2, (resnet_dim,), dtype, -lim, lim)
    w2 = jax.random.uniform(k3, (resnet_dim, embedding_dim), dtype, -lim, lim)
    b2 = jax.random.uniform(k4, (embedding_dim,), dtype, -lim, lim)
    return w1, b1, w2, b2


if __name__ == "__main__":
    key = jax.random.PRNGKey(0)
    k1, k2, k3, k4 = jax.random.split(key, 4)

    # --- Test 1: resident-weight path (small shapes) --------------------------
    batch, resnet_dim, embedding_dim = 32, 128, 64
    x = jax.random.normal(k1, (batch, resnet_dim), jnp.float32)
    w1, b1, w2, b2 = init_params(k2, resnet_dim, embedding_dim)
    params = prepare_params(w1, b1, w2, b2)          # one-time cast + pad
    out = jax.block_until_ready(
        projection_head(x, *params, embedding_dim=embedding_dim))
    ref = jnp.maximum(x @ w1 + b1, 0.0) @ w2 + b2     # pure-f32 reference
    assert out.shape == (batch, embedding_dim)
    assert jnp.allclose(out, ref, atol=5e-2, rtol=5e-2), "resident path mismatch"

    # --- Test 2: forced K-tiled streamed-weight path (large-D fallback) -------
    batch2, resnet_dim2, embedding_dim2 = 48, 256, 192
    x2 = jax.random.normal(k3, (batch2, resnet_dim2), jnp.float32)
    w1b, b1b, w2b, b2b = init_params(k4, resnet_dim2, embedding_dim2)
    params2 = prepare_params(w1b, b1b, w2b, b2b)
    out2 = jax.block_until_ready(
        projection_head(x2, *params2, embedding_dim=embedding_dim2,
                        force_ktiled=True, k_block=128))
    ref2 = jnp.maximum(x2 @ w1b + b1b, 0.0) @ w2b + b2b
    assert out2.shape == (batch2, embedding_dim2)
    assert jnp.allclose(out2, ref2, atol=5e-2, rtol=5e-2), "k-tiled path mismatch"

    print("KERNEL_OK")
</pallas_src>

<mosaic_0001>
module attributes {stable_mosaic.version = 11 : i64} {
  func.func @kernel(%arg0: i32, %arg1: memref<16x128xbf16, #tpu.memory_space<vmem>>, %arg2: memref<128x128xbf16, #tpu.memory_space<vmem>>, %arg3: memref<1x128xf32, #tpu.memory_space<vmem>>, %arg4: memref<128x128xbf16, #tpu.memory_space<vmem>>, %arg5: memref<1x128xf32, #tpu.memory_space<vmem>>, %arg6: memref<16x128xf32, #tpu.memory_space<vmem>>) attributes {dimension_semantics = [#tpu.dimension_semantics<parallel>], iteration_bounds = array<i64: 2>, scalar_prefetch = 0 : i64, scratch_operands = 0 : i64, tpu.core_type = #tpu.core_type<tc>, window_params = [{transform_indices = @transform_0, window_bounds = array<i64: 16, 128>}, {pipeline_mode = #tpu.pipeline_mode<synchronous>, transform_indices = @transform_1, window_bounds = array<i64: 128, 128>}, {pipeline_mode = #tpu.pipeline_mode<synchronous>, transform_indices = @transform_2, window_bounds = array<i64: 1, 128>}, {pipeline_mode = #tpu.pipeline_mode<synchronous>, transform_indices = @transform_3, window_bounds = array<i64: 128, 128>}, {pipeline_mode = #tpu.pipeline_mode<synchronous>, transform_indices = @transform_4, window_bounds = array<i64: 1, 128>}, {transform_indices = @transform_5, window_bounds = array<i64: 16, 128>}]} {
    %c0 = arith.constant 0 : index
    %c0_0 = arith.constant 0 : index
    %0 = vector.load %arg1[%c0, %c0_0] : memref<16x128xbf16, #tpu.memory_space<vmem>>, vector<16x128xbf16>
    %c0_1 = arith.constant 0 : index
    %c0_2 = arith.constant 0 : index
    %1 = vector.load %arg2[%c0_1, %c0_2] : memref<128x128xbf16, #tpu.memory_space<vmem>>, vector<128x128xbf16>
    %cst = arith.constant dense<0.000000e+00> : vector<16x128xf32>
    %2 = tpu.matmul %0, %1, %cst {dimension_numbers = #tpu.dot_dimension_numbers<[1], [0], [0], [1], [0, 0, 1, 1], [], []>} : vector<16x128xbf16>, vector<128x128xbf16>, vector<16x128xf32> -> vector<16x128xf32>
    %c0_3 = arith.constant 0 : index
    %c0_4 = arith.constant 0 : index
    %3 = vector.load %arg3[%c0_3, %c0_4] : memref<1x128xf32, #tpu.memory_space<vmem>>, vector<1x128xf32>
    %4 = vector.broadcast %3 : vector<1x128xf32> to vector<16x128xf32>
    %5 = arith.addf %2, %4 : vector<16x128xf32>
    %cst_5 = arith.constant 0.000000e+00 : f32
    %6 = vector.broadcast %cst_5 : f32 to vector<16x128xf32>
    %7 = arith.maximumf %5, %6 : vector<16x128xf32>
    %8 = arith.truncf %7 : vector<16x128xf32> to vector<16x128xbf16>
    %c0_6 = arith.constant 0 : index
    %c0_7 = arith.constant 0 : index
    %9 = vector.load %arg4[%c0_6, %c0_7] : memref<128x128xbf16, #tpu.memory_space<vmem>>, vector<128x128xbf16>
    %cst_8 = arith.constant dense<0.000000e+00> : vector<16x128xf32>
    %10 = tpu.matmul %8, %9, %cst_8 {dimension_numbers = #tpu.dot_dimension_numbers<[1], [0], [0], [1], [0, 0, 1, 1], [], []>} : vector<16x128xbf16>, vector<128x128xbf16>, vector<16x128xf32> -> vector<16x128xf32>
    %c0_9 = arith.constant 0 : index
    %c0_10 = arith.constant 0 : index
    %11 = vector.load %arg5[%c0_9, %c0_10] : memref<1x128xf32, #tpu.memory_space<vmem>>, vector<1x128xf32>
    %12 = vector.broadcast %11 : vector<1x128xf32> to vector<16x128xf32>
    %13 = arith.addf %10, %12 : vector<16x128xf32>
    %c0_11 = arith.constant 0 : index
    %c0_12 = arith.constant 0 : index
    %14 = vector.load %arg6[%c0_11, %c0_12] : memref<16x128xf32, #tpu.memory_space<vmem>>, vector<16x128xf32>
    tpu.vector_store %arg6[%c0_11, %c0_12], %13 {strides = array<i32>} : memref<16x128xf32, #tpu.memory_space<vmem>>, vector<16x128xf32>,
    return
  }
  func.func @transform_0(%arg0: i32) -> (i32, i32) {
    %c0_i32 = arith.constant 0 : i32
    %c0_i32_0 = arith.constant 0 : i32
    return %arg0, %c0_i32 : i32, i32
  }
  func.func @transform_1(%arg0: i32) -> (i32, i32) {
    %c0_i32 = arith.constant 0 : i32
    %c0_i32_0 = arith.constant 0 : i32
    %c0_i32_1 = arith.constant 0 : i32
    return %c0_i32, %c0_i32_0 : i32, i32
  }
  func.func @transform_2(%arg0: i32) -> (i32, i32) {
    %c0_i32 = arith.constant 0 : i32
    %c0_i32_0 = arith.constant 0 : i32
    %c0_i32_1 = arith.constant 0 : i32
    return %c0_i32, %c0_i32_0 : i32, i32
  }
  func.func @transform_3(%arg0: i32) -> (i32, i32) {
    %c0_i32 = arith.constant 0 : i32
    %c0_i32_0 = arith.constant 0 : i32
    %c0_i32_1 = arith.constant 0 : i32
    return %c0_i32, %c0_i32_0 : i32, i32
  }
  func.func @transform_4(%arg0: i32) -> (i32, i32) {
    %c0_i32 = arith.constant 0 : i32
    %c0_i32_0 = arith.constant 0 : i32
    %c0_i32_1 = arith.constant 0 : i32
    return %c0_i32, %c0_i32_0 : i32, i32
  }
  func.func @transform_5(%arg0: i32) -> (i32, i32) {
    %c0_i32 = arith.constant 0 : i32
    %c0_i32_0 = arith.constant 0 : i32
    return %arg0, %c0_i32 : i32, i32
  }
}

</mosaic_0001>

<llo_original>
// kernel: projection_head.1
$region0: #{projection_head.1}
  #allocation0 [shape = 'u32[]', space=smem, size = 0x4, offset = 0x4, fixed_abs, tag = 'smem constant byte address 0x4 - core index']
  #allocation1 [shape = 'u32[72,128]{1,0:T(1,128)}', space=vmem, size = 0x9000, scoped, tag = 'internal scratch']
  %s0 = inlined_call_operand.vmem [shape: bf16[32,128], index: 0, kind: input, shape index: {}]
  %s1 = inlined_call_operand.hbm [shape: bf16[128,128], index: 1, kind: input, shape index: {}]
  %s2 = inlined_call_operand.vmem [shape: f32[1,128], index: 2, kind: input, shape index: {}]
  %s3 = inlined_call_operand.hbm [shape: bf16[128,128], index: 3, kind: input, shape index: {}]
  %s4 = inlined_call_operand.vmem [shape: f32[1,128], index: 4, kind: input, shape index: {}]
  %s5 = inlined_call_operand.hbm [shape: f32[32,128], index: 5, kind: output, shape index: {}]
  %s6 = sld [smem:[#allocation0]]
  $region61: #{projection_head.1} parent=0
    _
  %s8 = ssub.s32 1, %s6
  %s9 = scalar_select 0, %s8, %s6
  $region1: #{projection_head.1} parent=0
    #allocation2 [shape = 'u8[32768]{0}', space=vmem, size = 0x8000, scoped, tag = 'input window, operand 1, single buffered']
    #allocation3 [shape = 's32[2]{0}', space=sflag, size = 0x8, scoped, tag = 'scoped memory for projection_head.1']
    #allocation4 [shape = 's32[2]{0}', space=sflag, size = 0x8, scoped, tag = 'scoped memory for projection_head.1']
    #allocation5 [shape = 'u8[32768]{0}', space=vmem, size = 0x8000, scoped, tag = 'input window, operand 3, single buffered']
    #allocation6 [shape = 's32[1]{0}', space=sflag, size = 0x4, scoped, tag = 'scoped memory for projection_head.1']
    #allocation7 [shape = 'u8[16384]{0}', space=vmem, size = 0x4000, scoped, tag = 'output window, operand 0']
    %10 = vsyncpa [#allocation3], 0
    %11 = vsyncpa [#allocation6], 0
    %12 = vsyncpa [#allocation4], 0
    %s13 = scalar_lea.sflag [#allocation4], 1
    %14 = vsyncpa %s13, 0
    loop: start=0, step=1, limit=4
    $region2: #{projection_head.1} parent=1 // loop_pre_header
      _
    $region3: #{projection_head.1} parent=1 // loop_header
      %s16 = sphi 0, %s20
      %p17 = scmp.ge.s32.totalorder %s16, 4
      %s26 = sphi 0, %s28
      %s29 = sphi 0, %s26
      %s30 = sphi 0, %s29
      %s46 = sphi 0, %s30
      %s50 = sphi 0, %s50
      %s52 = sphi 0, %s50
      %s53 = sphi 0, %s52
      %s67 = sphi 0, %s53
      %s71 = sphi 0, %s71
      %s73 = sphi 0, %s71
      %s74 = sphi 0, %s73
      %s88 = sphi 0, %s74
      %s92 = sphi 0, %s92
      %s94 = sphi 0, %s92
      %s95 = sphi 0, %s94
      %s109 = sphi 0, %s95
      %s113 = sphi 0, %s113
      %s115 = sphi 0, %s113
      %s116 = sphi 0, %s115
      %s130 = sphi 0, %s116
      %s136 = sphi 0, %s138
      %s139 = sphi 0, %s136
      %s140 = sphi 0, %s139
      %s156 = sphi 0, %s140
    $region4: #{projection_head.1} parent=1 // loop_header_branch
      %19 = sbr.rel (%p17) target = $region8
    $region5: #{projection_head.1} parent=1 // loop_body
      %s21 = ssub.s32 %s16, 1
      %s22 = ssub.s32 %s16, 2
      %s23 = sadd.s32 %s16, 1
      %s24 = ssub.s32 %s16, %s23
      %p25 = scmp.eq.s32.totalorder %s24, 0
      %s27 = sadd.s32 %s26, 1
      %s28 = scalar_select %p25, %s26, %s27
      %p31 = pneg %p25
      %p32 = scmp.eq.s32.totalorder %s16, 1
      %p33 = por %p31, %p32
      %p34 = scmp.ne.s32.totalorder %s26, %s29
      %p35 = scmp.eq.s32.totalorder %s16, 0
      %p36 = por %p34, %p35
      %p37 = scmp.ne.s32.totalorder %s26, %s29
      %p38 = scmp.eq.s32.totalorder %s21, 1
      %p39 = por %p37, %p38
      %p40 = scmp.ne.s32.totalorder %s29, %s30
      %p41 = scmp.eq.s32.totalorder %s21, 0
      %p42 = por %p40, %p41
      %p43 = scmp.ne.s32.totalorder %s29, %s30
      %p44 = scmp.eq.s32.totalorder %s22, 1
      %p45 = por %p43, %p44
      %p47 = scmp.ne.s32.totalorder %s30, %s46
      %p48 = scmp.eq.s32.totalorder %s22, 0
      %p49 = por %p47, %p48
      %s51 = sadd.s32 %s50, 1
      %p54 = scmp.eq.s32.totalorder %s16, 1
      %p55 = scmp.ne.s32.totalorder %s50, %s52
      %p56 = scmp.eq.s32.totalorder %s16, 0
      %p57 = por %p55, %p56
      %p58 = scmp.ne.s32.totalorder %s50, %s52
      %p59 = scmp.eq.s32.totalorder %s21, 1
      %p60 = por %p58, %p59
      %p61 = scmp.ne.s32.totalorder %s52, %s53
      %p62 = scmp.eq.s32.totalorder %s21, 0
      %p63 = por %p61, %p62
      %p64 = scmp.ne.s32.totalorder %s52, %s53
      %p65 = scmp.eq.s32.totalorder %s22, 1
      %p66 = por %p64, %p65
      %p68 = scmp.ne.s32.totalorder %s53, %s67
      %p69 = scmp.eq.s32.totalorder %s22, 0
      %p70 = por %p68, %p69
      %s72 = sadd.s32 %s71, 1
      %p75 = scmp.eq.s32.totalorder %s16, 1
      %p76 = scmp.ne.s32.totalorder %s71, %s73
      %p77 = scmp.eq.s32.totalorder %s16, 0
      %p78 = por %p76, %p77
      %p79 = scmp.ne.s32.totalorder %s71, %s73
      %p80 = scmp.eq.s32.totalorder %s21, 1
      %p81 = por %p79, %p80
      %p82 = scmp.ne.s32.totalorder %s73, %s74
      %p83 = scmp.eq.s32.totalorder %s21, 0
      %p84 = por %p82, %p83
      %p85 = scmp.ne.s32.totalorder %s73, %s74
      %p86 = scmp.eq.s32.totalorder %s22, 1
      %p87 = por %p85, %p86
      %p89 = scmp.ne.s32.totalorder %s74, %s88
      %p90 = scmp.eq.s32.totalorder %s22, 0
      %p91 = por %p89, %p90
      %s93 = sadd.s32 %s92, 1
      %p96 = scmp.eq.s32.totalorder %s16, 1
      %p97 = scmp.ne.s32.totalorder %s92, %s94
      %p98 = scmp.eq.s32.totalorder %s16, 0
      %p99 = por %p97, %p98
      %p100 = scmp.ne.s32.totalorder %s92, %s94
      %p101 = scmp.eq.s32.totalorder %s21, 1
      %p102 = por %p100, %p101
      %p103 = scmp.ne.s32.totalorder %s94, %s95
      %p104 = scmp.eq.s32.totalorder %s21, 0
      %p105 = por %p103, %p104
      %p106 = scmp.ne.s32.totalorder %s94, %s95
      %p107 = scmp.eq.s32.totalorder %s22, 1
      %p108 = por %p106, %p107
      %p110 = scmp.ne.s32.totalorder %s95, %s109
      %p111 = scmp.eq.s32.totalorder %s22, 0
      %p112 = por %p110, %p111
      %s114 = sadd.s32 %s113, 1
      %p117 = scmp.eq.s32.totalorder %s16, 1
      %p118 = scmp.ne.s32.totalorder %s113, %s115
      %p119 = scmp.eq.s32.totalorder %s16, 0
      %p120 = por %p118, %p119
      %p121 = scmp.ne.s32.totalorder %s113, %s115
      %p122 = scmp.eq.s32.totalorder %s21, 1
      %p123 = por %p121, %p122
      %p124 = scmp.ne.s32.totalorder %s115, %s116
      %p125 = scmp.eq.s32.totalorder %s21, 0
      %p126 = por %p124, %p125
      %p127 = scmp.ne.s32.totalorder %s115, %s116
      %p128 = scmp.eq.s32.totalorder %s22, 1
      %p129 = por %p127, %p128
      %p131 = scmp.ne.s32.totalorder %s116, %s130
      %p132 = scmp.eq.s32.totalorder %s22, 0
      %p133 = por %p131, %p132
      %s134 = ssub.s32 %s16, %s23
      %p135 = scmp.eq.s32.totalorder %s134, 0
      %s137 = sadd.s32 %s136, 1
      %s138 = scalar_select %p135, %s136, %s137
      %p141 = pneg %p135
      %p142 = scmp.eq.s32.totalorder %s16, 1
      %p143 = por %p141, %p142
      %p144 = scmp.ne.s32.totalorder %s136, %s139
      %p145 = scmp.eq.s32.totalorder %s16, 0
      %p146 = por %p144, %p145
      %p147 = scmp.ne.s32.totalorder %s136, %s139
      %p148 = scmp.eq.s32.totalorder %s21, 1
      %p149 = por %p147, %p148
      %p150 = scmp.ne.s32.totalorder %s139, %s140
      %p151 = scmp.eq.s32.totalorder %s21, 0
      %p152 = por %p150, %p151
      %p153 = scmp.ne.s32.totalorder %s139, %s140
      %p154 = scmp.eq.s32.totalorder %s22, 1
      %p155 = por %p153, %p154
      %p157 = scmp.ne.s32.totalorder %s140, %s156
      %p158 = scmp.eq.s32.totalorder %s22, 0
      %p159 = por %p157, %p158
      %p160 = scmp.le.s32.totalorder 1, %s16
      %p161 = scmp.lt.s32.totalorder %s16, 3
      %p162 = pnand %p160, %p161
      %p163 = pneg %p162
      // Predicated region
      $region9: #{projection_head.1} parent=5 // pred_check
        _
      $region10: #{projection_head.1} parent=5 // pred_check_branch
        %165 = sbr.rel (%p162) target = $region12
      $region11: #{projection_head.1} parent=5 // pred_region
        %s166 = ssub.s32 %s16, 1
        // Predicated region
        $region13: #{projection_head.1} parent=11 // pred_check
          %p167 = pneg %p63
        $region14: #{projection_head.1} parent=11 // pred_check_branch
          %169 = sbr.rel (%p167) target = $region16
        $region15: #{projection_head.1} parent=11 // pred_region
          %171 = vsyncadd [#allocation3], 0
          %s172 = sshll.u32 %s1, 4
          %s173 = int_to_ptr.hbm [resolvable:$true] %s172
          %s174 = sshll.u32 [#allocation2], 4
          %s175 = int_to_ptr.vmem [resolvable:$true] %s174
          %180 = dma.hbm_to_vmem [thread:$0]  %s173, 1024, %s175, [#allocation3], 64, 64, 4
        $region16: #{projection_head.1} parent=11 // pred_fallthru
          _
        // Predicated region
        $region17: #{projection_head.1} parent=11 // pred_check
          %p181 = pneg %p84
        $region18: #{projection_head.1} parent=11 // pred_check_branch
          %183 = sbr.rel (%p181) target = $region20
        $region19: #{projection_head.1} parent=11 // pred_region
          _
        $region20: #{projection_head.1} parent=11 // pred_fallthru
          _
        // Predicated region
        $region21: #{projection_head.1} parent=11 // pred_check
          %p184 = pneg %p105
        $region22: #{projection_head.1} parent=11 // pred_check_branch
          %186 = sbr.rel (%p184) target = $region24
        $region23: #{projection_head.1} parent=11 // pred_region
          %188 = vsyncadd [#allocation6], 0
          %s189 = sshll.u32 %s3, 4
          %s190 = int_to_ptr.hbm [resolvable:$true] %s189
          %s191 = sshll.u32 [#allocation5], 4
          %s192 = int_to_ptr.vmem [resolvable:$true] %s191
          %197 = dma.hbm_to_vmem [thread:$0]  %s190, 1024, %s192, [#allocation6], 64, 64, 4
        $region24: #{projection_head.1} parent=11 // pred_fallthru
          _
        // Predicated region
        $region25: #{projection_head.1} parent=11 // pred_check
          %p198 = pneg %p126
        $region26: #{projection_head.1} parent=11 // pred_check_branch
          %200 = sbr.rel (%p198) target = $region28
        $region27: #{projection_head.1} parent=11 // pred_region
          _
        $region28: #{projection_head.1} parent=11 // pred_fallthru
          _
      $region12: #{projection_head.1} parent=5 // pred_fallthru
        _
      %p201 = scmp.lt.s32.totalorder %s16, 2
      // Predicated region
      $region29: #{projection_head.1} parent=5 // pred_check
        %p202 = pneg %p201
      $region30: #{projection_head.1} parent=5 // pred_check_branch
        %204 = sbr.rel (%p202) target = $region32
      $region31: #{projection_head.1} parent=5 // pred_region
        // Predicated region
        $region33: #{projection_head.1} parent=31 // pred_check
          %p205 = pneg %p36
        $region34: #{projection_head.1} parent=31 // pred_check_branch
          %207 = sbr.rel (%p205) target = $region36
        $region35: #{projection_head.1} parent=31 // pred_region
          %s208 = smul.u32 2, %s16
          %p209 = scmp.lt.s32.totalorder %s208, 3
          %s210 = scalar_select %p209, %s208, 3
          %s211 = smul.addr %s210, 4
          %s212 = scalar_lea.vmem %s0, %s211
          %s213 = smul.u32 2, %s16
        $region36: #{projection_head.1} parent=31 // pred_fallthru
          _
      $region32: #{projection_head.1} parent=5 // pred_fallthru
        _
      %p214 = scmp.le.s32.totalorder 1, %s16
      %p215 = scmp.lt.s32.totalorder %s16, 3
      %p216 = pnand %p214, %p215
      %p217 = pneg %p216
      // Predicated region
      $region37: #{projection_head.1} parent=5 // pred_check
        _
      $region38: #{projection_head.1} parent=5 // pred_check_branch
        %219 = sbr.rel (%p216) target = $region40
      $region39: #{projection_head.1} parent=5 // pred_region
        %s220 = ssub.s32 %s16, 1
        // Predicated region
        $region41: #{projection_head.1} parent=39 // pred_check
          %p221 = pneg %p63
        $region42: #{projection_head.1} parent=39 // pred_check_branch
          %223 = sbr.rel (%p221) target = $region44
        $region43: #{projection_head.1} parent=39 // pred_region
          %225 = dma.done [#allocation3], 1024
        $region44: #{projection_head.1} parent=39 // pred_fallthru
          _
        // Predicated region
        $region45: #{projection_head.1} parent=39 // pred_check
          %p226 = pneg %p105
        $region46: #{projection_head.1} parent=39 // pred_check_branch
          %228 = sbr.rel (%p226) target = $region48
        $region47: #{projection_head.1} parent=39 // pred_region
          %230 = dma.done [#allocation6], 1024
        $region48: #{projection_head.1} parent=39 // pred_fallthru
          _
        %s231 = smul.u32 2, %s21
        %p232 = scmp.lt.s32.totalorder %s231, 3
        %s233 = scalar_select %p232, %s231, 3
        %s234 = smul.addr %s233, 4
        %s235 = scalar_lea.vmem %s0, %s234
        %p236 = pneg %p42
        %p237 = pneg %p39
        %p238 = pneg %p63
        %p239 = pneg %p60
        %p240 = pneg %p84
        %p241 = pneg %p81
        %p242 = pneg %p105
        %p243 = pneg %p102
        %p244 = pneg %p126
        %p245 = pneg %p123
        %p246 = pneg %p152
        %p247 = pneg %p149
        %s248 = sand.u32 %s139, 1
        %s249 = scalar_lea.sflag [#allocation4], %s248
        %s250 = sand.u32 %s139, 1
        %s251 = smul.addr %s250, 16
        %s252 = scalar_lea.vmem [#allocation7], %s251
        %s253 = smul.u32 2, %s21
        %p254 = scmp.lt.s32.totalorder %s253, 3
        %s255 = scalar_select %p254, %s253, 3
        %s256 = smul.addr %s255, 4
        %s257 = scalar_lea.vmem %s0, %s256
        %s258 = smul.u32 2, %s21
        %s259 = smul.u32 2, %s21
        %v260 = vld [vmem:[%s257] sm:$0xf]
        %v261 = vld [vmem:[%s257 + $0x4] sm:$0xf]
        %v262 = vld [vmem:[#allocation2] sm:$0xf]
        %v263 = vld [vmem:[#allocation2 + $0x4] sm:$0xf]
        %v264 = vld [vmem:[#allocation2 + $0x8] sm:$0xf]
        %v265 = vld [vmem:[#allocation2 + $0xc] sm:$0xf]
        %v266 = vld [vmem:[#allocation2 + $0x10] sm:$0xf]
        %v267 = vld [vmem:[#allocation2 + $0x14] sm:$0xf]
        %v268 = vld [vmem:[#allocation2 + $0x18] sm:$0xf]
        %v269 = vld [vmem:[#allocation2 + $0x1c] sm:$0xf]
        %v270 = vld [vmem:[#allocation2 + $0x20] sm:$0xf]
        %v271 = vld [vmem:[#allocation2 + $0x24] sm:$0xf]
        %v272 = vld [vmem:[#allocation2 + $0x28] sm:$0xf]
        %v273 = vld [vmem:[#allocation2 + $0x2c] sm:$0xf]
        %v274 = vld [vmem:[#allocation2 + $0x30] sm:$0xf]
        %v275 = vld [vmem:[#allocation2 + $0x34] sm:$0xf]
        %v276 = vld [vmem:[#allocation2 + $0x38] sm:$0xf]
        %v277 = vld [vmem:[#allocation2 + $0x3c] sm:$0xf]
        %v278 = vld [vmem:[%s2] sm:$0x1]
        %v280 = vperm.slane %v278, 0
        %v284 = vunpack.c.l.b16 %v260
        %v285 = vunpack.c.l.b16 %v261
        %v286 = vpack.c.b16 %v285, %v284
        %v304 = vunpack.c.l.b16 %v262
        %v305 = vunpack.c.l.b16 %v263
        %v306 = vunpack.c.l.b16 %v264
        %v307 = vunpack.c.l.b16 %v265
        %v308 = vunpack.c.l.b16 %v266
        %v309 = vunpack.c.l.b16 %v267
        %v310 = vunpack.c.l.b16 %v268
        %v311 = vunpack.c.l.b16 %v269
        %v312 = vunpack.c.l.b16 %v270
        %v313 = vunpack.c.l.b16 %v271
        %v314 = vunpack.c.l.b16 %v272
        %v315 = vunpack.c.l.b16 %v273
        %v316 = vunpack.c.l.b16 %v274
        %v317 = vunpack.c.l.b16 %v275
        %v318 = vunpack.c.l.b16 %v276
        %v319 = vunpack.c.l.b16 %v277
        %v320 = vpack.c.b16 %v305, %v304
        %v321 = vpack.c.b16 %v307, %v306
        %v322 = vpack.c.b16 %v309, %v308
        %v323 = vpack.c.b16 %v311, %v310
        %v324 = vpack.c.b16 %v313, %v312
        %v325 = vpack.c.b16 %v315, %v314
        %v326 = vpack.c.b16 %v317, %v316
        %v327 = vpack.c.b16 %v319, %v318
        %336 = vmatpush.bf16.msra.mxu0 %v327
        %337 = vmatpush.bf16.msra.mxu0 %v326
        %338 = vmatpush.bf16.msra.mxu0 %v325
        %339 = vmatpush.bf16.msra.mxu0 %v324
        %340 = vmatpush.bf16.msra.mxu0 %v323
        %341 = vmatpush.bf16.msra.mxu0 %v322
        %342 = vmatpush.bf16.msra.mxu0 %v321
        %343 = vmatpush.bf16.msra.mxu0 %v320
        %344 = vmatmul.bf16.gmra.mxu0 %v286
        %v345 = vpop.f32.mrf.mxu0
        %v346 = vadd.f32 %v280, %v345
        %v347 = vpop.f32.mrf.mxu0
        %v348 = vadd.f32 %v280, %v347
        %349 = vdwg.mxu0
        %v350 = vmax.f32 %v346, 0.0
        %v351 = vmax.f32 %v348, 0.0
        %v352 = vpack.c.bf16 %v351, %v350
        %v353 = vld [vmem:[#allocation5] sm:$0xf]
        %v354 = vld [vmem:[#allocation5 + $0x4] sm:$0xf]
        %v355 = vld [vmem:[#allocation5 + $0x8] sm:$0xf]
        %v356 = vld [vmem:[#allocation5 + $0xc] sm:$0xf]
        %v357 = vld [vmem:[#allocation5 + $0x10] sm:$0xf]
        %v358 = vld [vmem:[#allocation5 + $0x14] sm:$0xf]
        %v359 = vld [vmem:[#allocation5 + $0x18] sm:$0xf]
        %v360 = vld [vmem:[#allocation5 + $0x1c] sm:$0xf]
        %v361 = vld [vmem:[#allocation5 + $0x20] sm:$0xf]
        %v362 = vld [vmem:[#allocation5 + $0x24] sm:$0xf]
        %v363 = vld [vmem:[#allocation5 + $0x28] sm:$0xf]
        %v364 = vld [vmem:[#allocation5 + $0x2c] sm:$0xf]
        %v365 = vld [vmem:[#allocation5 + $0x30] sm:$0xf]
        %v366 = vld [vmem:[#allocation5 + $0x34] sm:$0xf]
        %v367 = vld [vmem:[#allocation5 + $0x38] sm:$0xf]
        %v368 = vld [vmem:[#allocation5 + $0x3c] sm:$0xf]
        %v369 = vld [vmem:[%s4] sm:$0x1]
        %v371 = vperm.slane %v369, 0
        %v389 = vunpack.c.l.b16 %v353
        %v390 = vunpack.c.l.b16 %v354
        %v391 = vunpack.c.l.b16 %v355
        %v392 = vunpack.c.l.b16 %v356
        %v393 = vunpack.c.l.b16 %v357
        %v394 = vunpack.c.l.b16 %v358
        %v395 = vunpack.c.l.b16 %v359
        %v396 = vunpack.c.l.b16 %v360
        %v397 = vunpack.c.l.b16 %v361
        %v398 = vunpack.c.l.b16 %v362
        %v399 = vunpack.c.l.b16 %v363
        %v400 = vunpack.c.l.b16 %v364
        %v401 = vunpack.c.l.b16 %v365
        %v402 = vunpack.c.l.b16 %v366
        %v403 = vunpack.c.l.b16 %v367
        %v404 = vunpack.c.l.b16 %v368
        %v405 = vpack.c.b16 %v390, %v389
        %v406 = vpack.c.b16 %v392, %v391
        %v407 = vpack.c.b16 %v394, %v393
        %v408 = vpack.c.b16 %v396, %v395
        %v409 = vpack.c.b16 %v398, %v397
        %v410 = vpack.c.b16 %v400, %v399
        %v411 = vpack.c.b16 %v402, %v401
        %v412 = vpack.c.b16 %v404, %v403
        %421 = vmatpush.bf16.msra.mxu0 %v412
        %422 = vmatpush.bf16.msra.mxu0 %v411
        %423 = vmatpush.bf16.msra.mxu0 %v410
        %424 = vmatpush.bf16.msra.mxu0 %v409
        %425 = vmatpush.bf16.msra.mxu0 %v408
        %426 = vmatpush.bf16.msra.mxu0 %v407
        %427 = vmatpush.bf16.msra.mxu0 %v406
        %428 = vmatpush.bf16.msra.mxu0 %v405
        %429 = vmatmul.bf16.gmra.mxu0 %v352
        %v430 = vpop.f32.mrf.mxu0
        %v431 = vadd.f32 %v371, %v430
        %v432 = vpop.f32.mrf.mxu0
        %v433 = vadd.f32 %v371, %v432
        %434 = vdwg.mxu0
        %435 = vst [vmem:[%s252] sm:$0xff] %v431
        %436 = vst [vmem:[%s252 + $0x8] sm:$0xff] %v433
        %s437 = sand.u32 %s139, 1
        %s438 = scalar_lea.sflag [#allocation4], %s437
        %s439 = sand.u32 %s139, 1
        %s440 = smul.addr %s439, 16
        %s441 = scalar_lea.vmem [#allocation7], %s440
        // Predicated region
        $region49: #{projection_head.1} parent=39 // pred_check
          %p442 = pneg %p149
        $region50: #{projection_head.1} parent=39 // pred_check_branch
          %444 = sbr.rel (%p442) target = $region52
        $region51: #{projection_head.1} parent=39 // pred_region
          %s445 = smul.u32 2, %s21
          %447 = vsyncadd %s438, 0
          %s448 = smul.addr %s445, 8
          %s449 = scalar_lea.hbm %s5, %s448
          %s450 = sshll.u32 %s441, 4
          %s451 = int_to_ptr.vmem [resolvable:$true] %s450
          %s452 = sshll.u32 %s449, 4
          %s453 = int_to_ptr.hbm [resolvable:$true] %s452
          %458 = dma.vmem_to_hbm [thread:$0]  %s451, 256, %s453, %s438, 128, 128, 8
        $region52: #{projection_head.1} parent=39 // pred_fallthru
          _
      $region40: #{projection_head.1} parent=5 // pred_fallthru
        _
      %p459 = scmp.le.s32.totalorder 2, %s16
      // Predicated region
      $region53: #{projection_head.1} parent=5 // pred_check
        %p460 = pneg %p459
      $region54: #{projection_head.1} parent=5 // pred_check_branch
        %462 = sbr.rel (%p460) target = $region56
      $region55: #{projection_head.1} parent=5 // pred_region
        %s463 = ssub.s32 %s16, 2
        // Predicated region
        $region57: #{projection_head.1} parent=55 // pred_check
          %p464 = pneg %p155
        $region58: #{projection_head.1} parent=55 // pred_check_branch
          %466 = sbr.rel (%p464) target = $region60
        $region59: #{projection_head.1} parent=55 // pred_region
          %s467 = sand.u32 %s140, 1
          %s468 = scalar_lea.sflag [#allocation4], %s467
          %s469 = sand.u32 %s140, 1
          %s470 = smul.addr %s469, 16
          %s471 = scalar_lea.vmem [#allocation7], %s470
          %473 = dma.done %s468, 256
        $region60: #{projection_head.1} parent=55 // pred_fallthru
          _
      $region56: #{projection_head.1} parent=5 // pred_fallthru
        _
    $region6: #{projection_head.1} parent=1 // loop_footer
      %s20 = sadd.s32 1, %s16
    $region7: #{projection_head.1} parent=1 // loop_footer_branch
      %15 = sbr.rel target = $region3
    $region8: #{projection_head.1} parent=1 // loop_exit
      _
    %474 = vsyncpa [#allocation3], 1
    %s475 = scalar_lea.sflag [#allocation3], 1
    %476 = vsyncpa %s475, 1
    %477 = vsyncpa [#allocation6], 1
    %478 = vsyncpa [#allocation4], 1
    %s479 = scalar_lea.sflag [#allocation4], 1
    %480 = vsyncpa %s479, 1

</llo_original>
